<compile_context>
chip_gen: v6e
topology: v6e:2x2x1
jax: 0.10.0
libtpu: 0.0.40
codegen_flags: <defaults>
</compile_context>

<pallas_src>
import jax
import jax.numpy as jnp
from jax.experimental import pallas as pl
from jax.experimental.pallas import tpu as pltpu

LEAKY_SLOPE = 0.01   # nn.LeakyReLU default
N_NUM = 2
T = 1.0              # softmax temperature in AttentionLayer

H1_RAW, H1 = 500, 512   # fc1 out, padded to a lane multiple
H2_RAW, H2 = 100, 128   # fc2 out, padded to a lane multiple
H3 = 128                # fc3 out (n_num=2) padded to a full lane tile

WEIGHT_DTYPE = jnp.bfloat16   # halves weight DMA bytes; f32 accumulate on the MXU


def _leaky_relu(x):
    return jnp.where(x > 0, x, LEAKY_SLOPE * x)


def fusion_kernel(x_ref, k_ref, w1_ref, w23_ref, b_ref, out_ref):
    D = x_ref.shape[1]
    xb = x_ref[...].astype(WEIGHT_DTYPE)
    kb = k_ref[...].astype(WEIGHT_DTYPE)

    # fc1: split matmul over the (2D, 512) weight -- no concatenated input needed.
    h1 = (jnp.dot(xb, w1_ref[0:D, :], preferred_element_type=jnp.float32)
          + jnp.dot(kb, w1_ref[D:2 * D, :], preferred_element_type=jnp.float32)
          + b_ref[0:1, :])                                       # (B, 512) f32
    h1 = _leaky_relu(h1)

    # fc2: rows 0:512 of the packed (640, 128) weight slab.
    h2 = (jnp.dot(h1.astype(WEIGHT_DTYPE), w23_ref[0:H1, :],
                  preferred_element_type=jnp.float32)
          + b_ref[1:2, 0:H2])                                    # (B, 128) f32
    h2 = _leaky_relu(h2)

    # fc3 + sigmoid: rows 512:640 of the slab (only lanes 0,1 are meaningful).
    h3 = (jnp.dot(h2.astype(WEIGHT_DTYPE), w23_ref[H1:H1 + H2, :],
                  preferred_element_type=jnp.float32)
          + b_ref[2:3, 0:H3])                                    # (B, 128) f32
    s = 1.0 / (1.0 + jnp.exp(-h3))

    # 2-class softmax identity: softmax([s0, s1] / T)[0] == sigmoid((s0 - s1) / T).
    # Selector row [+1, -1, 0, ...] is preloaded as row 3 of the bias slab.
    diff = jnp.sum(s * b_ref[3:4, 0:H3], axis=1, keepdims=True)  # (B, 1) = s0 - s1
    att0 = 1.0 / (1.0 + jnp.exp(-diff / T))                      # (B, 1)

    fw0 = jnp.mean(att0, axis=0, keepdims=True)                  # (1, 1) batch mean
    # fw1 = 1 - fw0 exactly (softmax rows sum to 1), so:
    # out = fw0 * x + (1 - fw0) * k = k + fw0 * (x - k)
    out_ref[...] = k_ref[...] + fw0 * (x_ref[...] - k_ref[...])


def fusion_layer(x, k, params):
    """FusionLayer.forward(x, k) with padded/packed params."""
    B, D = x.shape
    w1, w23, bias = params
    vmem = pl.BlockSpec(memory_space=pltpu.MemorySpace.VMEM)
    return pl.pallas_call(
        fusion_kernel,
        out_shape=jax.ShapeDtypeStruct((B, D), jnp.float32),
        in_specs=[vmem] * 5,
        out_specs=vmem,
    )(x, k, w1, w23, bias)


def make_params(key, last_dim, n_num=N_NUM):
    """Kaiming-normal-style init matching the PyTorch shapes; returns packed + raw params."""
    k1, k2, k3, kb1, kb2, kb3 = jax.random.split(key, 6)
    in1 = n_num * last_dim

    # raw (PyTorch-shaped) parameters, stored pre-transposed for x @ W
    w1_raw = jax.random.normal(k1, (in1, H1_RAW), jnp.float32) * jnp.sqrt(2.0 / in1)
    b1_raw = jax.random.normal(kb1, (1, H1_RAW), jnp.float32) * 0.01
    w2_raw = jax.random.normal(k2, (H1_RAW, H2_RAW), jnp.float32) * jnp.sqrt(2.0 / H1_RAW)
    b2_raw = jax.random.normal(kb2, (1, H2_RAW), jnp.float32) * 0.01
    w3_raw = jax.random.normal(k3, (H2_RAW, n_num), jnp.float32) * jnp.sqrt(2.0 / H2_RAW)
    b3_raw = jax.random.normal(kb3, (1, n_num), jnp.float32) * 0.01

    # zero-padded, lane-friendly, bf16 versions for the kernel (padding is exact)
    w1 = jnp.zeros((in1, H1), jnp.float32).at[:, :H1_RAW].set(w1_raw)

    # fc2 + fc3 packed into a single (640, 128) slab: rows 0:512 = w2, 512:640 = w3.
    w23 = jnp.zeros((H1 + H2, H3), jnp.float32)
    w23 = w23.at[:H1_RAW, :H2_RAW].set(w2_raw)
    w23 = w23.at[H1:H1 + H2_RAW, :n_num].set(w3_raw)

    # bias slab (4, 512): b1 | b2 | b3 | softmax-difference selector [+1, -1, 0...]
    bias = jnp.zeros((4, H1), jnp.float32)
    bias = bias.at[0, :H1_RAW].set(b1_raw[0])
    bias = bias.at[1, :H2_RAW].set(b2_raw[0])
    bias = bias.at[2, :n_num].set(b3_raw[0])
    bias = bias.at[3, 0].set(1.0)
    bias = bias.at[3, 1].set(-1.0)

    packed = (w1.astype(WEIGHT_DTYPE), w23.astype(WEIGHT_DTYPE), bias)
    raw = (w1_raw, b1_raw, w2_raw, b2_raw, w3_raw, b3_raw)
    return packed, raw


def fusion_layer_ref(x, k, raw):
    """Pure-JAX f32 reference of the PyTorch FusionLayer forward."""
    w1, b1, w2, b2, w3s, b3s = raw
    y = jnp.concatenate([x, k], axis=1)
    h1 = _leaky_relu(y @ w1 + b1)
    h2 = _leaky_relu(h1 @ w2 + b2)
    s = jax.nn.sigmoid(h2 @ w3s + b3s)
    att = jax.nn.softmax(s / T, axis=1)
    weights = jnp.mean(att, axis=0)          # (n_num,)
    return weights[0] * x + weights[1] * k


if __name__ == "__main__":
    B, D = 8, 32       # batch=8, last_dim=32, n_num=2
    key = jax.random.PRNGKey(0)
    kx, kk, kp = jax.random.split(key, 3)
    x = jax.random.normal(kx, (B, D), jnp.float32)
    k = jax.random.normal(kk, (B, D), jnp.float32)

    params, raw = make_params(kp, D)

    out = fusion_layer(x, k, params)
    out = jax.block_until_ready(out)

    ref = fusion_layer_ref(x, k, raw)
    assert out.shape == (B, D)
    # bf16 weights / bf16 MXU passes -> relaxed tolerance vs. the f32 reference
    assert jnp.allclose(out, ref, atol=2e-2, rtol=2e-2), "mismatch vs reference"

    print("KERNEL_OK")
</pallas_src>

<mosaic_0001>
module attributes {stable_mosaic.version = 11 : i64} {
  func.func @fusion_kernel(%arg0: memref<8x32xf32, #tpu.memory_space<vmem>>, %arg1: memref<8x32xf32, #tpu.memory_space<vmem>>, %arg2: memref<64x512xbf16, #tpu.memory_space<vmem>>, %arg3: memref<640x128xbf16, #tpu.memory_space<vmem>>, %arg4: memref<4x512xf32, #tpu.memory_space<vmem>>, %arg5: memref<8x32xf32, #tpu.memory_space<vmem>>) attributes {dimension_semantics = [], scalar_prefetch = 0 : i64, scratch_operands = 0 : i64, tpu.core_type = #tpu.core_type<tc>} {
    %c0 = arith.constant 0 : index
    %c0_0 = arith.constant 0 : index
    %0 = vector.load %arg0[%c0, %c0_0] : memref<8x32xf32, #tpu.memory_space<vmem>>, vector<8x32xf32>
    %1 = arith.truncf %0 : vector<8x32xf32> to vector<8x32xbf16>
    %c0_1 = arith.constant 0 : index
    %c0_2 = arith.constant 0 : index
    %2 = vector.load %arg1[%c0_1, %c0_2] : memref<8x32xf32, #tpu.memory_space<vmem>>, vector<8x32xf32>
    %3 = arith.truncf %2 : vector<8x32xf32> to vector<8x32xbf16>
    %c0_3 = arith.constant 0 : index
    %c0_4 = arith.constant 0 : index
    %4 = vector.load %arg2[%c0_3, %c0_4] : memref<64x512xbf16, #tpu.memory_space<vmem>>, vector<32x512xbf16>
    %cst = arith.constant dense<0.000000e+00> : vector<8x512xf32>
    %5 = tpu.matmul %1, %4, %cst {dimension_numbers = #tpu.dot_dimension_numbers<[1], [0], [0], [1], [0, 0, 1, 1], [], []>} : vector<8x32xbf16>, vector<32x512xbf16>, vector<8x512xf32> -> vector<8x512xf32>
    %c32 = arith.constant 32 : index
    %c0_5 = arith.constant 0 : index
    %6 = vector.load %arg2[%c32, %c0_5] : memref<64x512xbf16, #tpu.memory_space<vmem>>, vector<32x512xbf16>
    %cst_6 = arith.constant dense<0.000000e+00> : vector<8x512xf32>
    %7 = tpu.matmul %3, %6, %cst_6 {dimension_numbers = #tpu.dot_dimension_numbers<[1], [0], [0], [1], [0, 0, 1, 1], [], []>} : vector<8x32xbf16>, vector<32x512xbf16>, vector<8x512xf32> -> vector<8x512xf32>
    %8 = arith.addf %5, %7 : vector<8x512xf32>
    %c0_7 = arith.constant 0 : index
    %c0_8 = arith.constant 0 : index
    %9 = vector.load %arg4[%c0_7, %c0_8] : memref<4x512xf32, #tpu.memory_space<vmem>>, vector<1x512xf32>
    %10 = vector.broadcast %9 : vector<1x512xf32> to vector<8x512xf32>
    %11 = arith.addf %8, %10 : vector<8x512xf32>
    %cst_9 = arith.constant 0.000000e+00 : f32
    %12 = vector.broadcast %cst_9 : f32 to vector<8x512xf32>
    %13 = arith.cmpf ogt, %11, %12 : vector<8x512xf32>
    %cst_10 = arith.constant 0.00999999977 : f32
    %14 = vector.broadcast %cst_10 : f32 to vector<8x512xf32>
    %15 = arith.mulf %14, %11 : vector<8x512xf32>
    %16 = arith.select %13, %11, %15 : vector<8x512xi1>, vector<8x512xf32>
    %17 = arith.truncf %16 : vector<8x512xf32> to vector<8x512xbf16>
    %c0_11 = arith.constant 0 : index
    %c0_12 = arith.constant 0 : index
    %18 = vector.load %arg3[%c0_11, %c0_12] : memref<640x128xbf16, #tpu.memory_space<vmem>>, vector<512x128xbf16>
    %cst_13 = arith.constant dense<0.000000e+00> : vector<8x128xf32>
    %19 = tpu.matmul %17, %18, %cst_13 {dimension_numbers = #tpu.dot_dimension_numbers<[1], [0], [0], [1], [0, 0, 1, 1], [], []>} : vector<8x512xbf16>, vector<512x128xbf16>, vector<8x128xf32> -> vector<8x128xf32>
    %c1 = arith.constant 1 : index
    %c0_14 = arith.constant 0 : index
    %20 = vector.load %arg4[%c1, %c0_14] : memref<4x512xf32, #tpu.memory_space<vmem>>, vector<1x128xf32>
    %21 = vector.broadcast %20 : vector<1x128xf32> to vector<8x128xf32>
    %22 = arith.addf %19, %21 : vector<8x128xf32>
    %cst_15 = arith.constant 0.000000e+00 : f32
    %23 = vector.broadcast %cst_15 : f32 to vector<8x128xf32>
    %24 = arith.cmpf ogt, %22, %23 : vector<8x128xf32>
    %cst_16 = arith.constant 0.00999999977 : f32
    %25 = vector.broadcast %cst_16 : f32 to vector<8x128xf32>
    %26 = arith.mulf %25, %22 : vector<8x128xf32>
    %27 = arith.select %24, %22, %26 : vector<8x128xi1>, vector<8x128xf32>
    %28 = arith.truncf %27 : vector<8x128xf32> to vector<8x128xbf16>
    %c512 = arith.constant 512 : index
    %c0_17 = arith.constant 0 : index
    %29 = vector.load %arg3[%c512, %c0_17] : memref<640x128xbf16, #tpu.memory_space<vmem>>, vector<128x128xbf16>
    %cst_18 = arith.constant dense<0.000000e+00> : vector<8x128xf32>
    %30 = tpu.matmul %28, %29, %cst_18 {dimension_numbers = #tpu.dot_dimension_numbers<[1], [0], [0], [1], [0, 0, 1, 1], [], []>} : vector<8x128xbf16>, vector<128x128xbf16>, vector<8x128xf32> -> vector<8x128xf32>
    %c2 = arith.constant 2 : index
    %c0_19 = arith.constant 0 : index
    %31 = vector.load %arg4[%c2, %c0_19] : memref<4x512xf32, #tpu.memory_space<vmem>>, vector<1x128xf32>
    %32 = vector.broadcast %31 : vector<1x128xf32> to vector<8x128xf32>
    %33 = arith.addf %30, %32 : vector<8x128xf32>
    %cst_20 = arith.constant 0.000000e+00 : f32
    %34 = vector.broadcast %cst_20 : f32 to vector<8x128xf32>
    %35 = arith.subf %34, %33 : vector<8x128xf32>
    %36 = math.exp %35 : vector<8x128xf32>
    %cst_21 = arith.constant 1.000000e+00 : f32
    %37 = vector.broadcast %cst_21 : f32 to vector<8x128xf32>
    %38 = arith.addf %37, %36 : vector<8x128xf32>
    %cst_22 = arith.constant 1.000000e+00 : f32
    %39 = vector.broadcast %cst_22 : f32 to vector<8x128xf32>
    %40 = arith.divf %39, %38 : vector<8x128xf32>
    %c3 = arith.constant 3 : index
    %c0_23 = arith.constant 0 : index
    %41 = vector.load %arg4[%c3, %c0_23] : memref<4x512xf32, #tpu.memory_space<vmem>>, vector<1x128xf32>
    %42 = vector.broadcast %41 : vector<1x128xf32> to vector<8x128xf32>
    %43 = arith.mulf %40, %42 : vector<8x128xf32>
    %cst_24 = arith.constant dense<0.000000e+00> : vector<8xf32>
    %44 = vector.multi_reduction <add>, %43, %cst_24 [1] : vector<8x128xf32> to vector<8xf32>
    %45 = vector.shape_cast %44 : vector<8xf32> to vector<8x1xf32>
    %cst_25 = arith.constant 0.000000e+00 : f32
    %46 = vector.broadcast %cst_25 : f32 to vector<8x1xf32>
    %47 = arith.subf %46, %45 : vector<8x1xf32>
    %cst_26 = arith.constant 1.000000e+00 : f32
    %48 = vector.broadcast %cst_26 : f32 to vector<8x1xf32>
    %49 = arith.divf %47, %48 : vector<8x1xf32>
    %50 = math.exp %49 : vector<8x1xf32>
    %cst_27 = arith.constant 1.000000e+00 : f32
    %51 = vector.broadcast %cst_27 : f32 to vector<8x1xf32>
    %52 = arith.addf %51, %50 : vector<8x1xf32>
    %cst_28 = arith.constant 1.000000e+00 : f32
    %53 = vector.broadcast %cst_28 : f32 to vector<8x1xf32>
    %54 = arith.divf %53, %52 : vector<8x1xf32>
    %cst_29 = arith.constant dense<0.000000e+00> : vector<1xf32>
    %55 = vector.multi_reduction <add>, %54, %cst_29 [0] : vector<8x1xf32> to vector<1xf32>
    %56 = vector.shape_cast %55 : vector<1xf32> to vector<1x1xf32>
    %cst_30 = arith.constant 8.000000e+00 : f32
    %57 = vector.broadcast %cst_30 : f32 to vector<1x1xf32>
    %58 = arith.divf %56, %57 : vector<1x1xf32>
    %c0_31 = arith.constant 0 : index
    %c0_32 = arith.constant 0 : index
    %59 = vector.load %arg1[%c0_31, %c0_32] : memref<8x32xf32, #tpu.memory_space<vmem>>, vector<8x32xf32>
    %c0_33 = arith.constant 0 : index
    %c0_34 = arith.constant 0 : index
    %60 = vector.load %arg0[%c0_33, %c0_34] : memref<8x32xf32, #tpu.memory_space<vmem>>, vector<8x32xf32>
    %c0_35 = arith.constant 0 : index
    %c0_36 = arith.constant 0 : index
    %61 = vector.load %arg1[%c0_35, %c0_36] : memref<8x32xf32, #tpu.memory_space<vmem>>, vector<8x32xf32>
    %62 = arith.subf %60, %61 : vector<8x32xf32>
    %63 = vector.broadcast %58 : vector<1x1xf32> to vector<8x32xf32>
    %64 = arith.mulf %63, %62 : vector<8x32xf32>
    %65 = arith.addf %59, %64 : vector<8x32xf32>
    %c0_37 = arith.constant 0 : index
    %c0_38 = arith.constant 0 : index
    %66 = vector.load %arg5[%c0_37, %c0_38] : memref<8x32xf32, #tpu.memory_space<vmem>>, vector<8x32xf32>
    tpu.vector_store %arg5[%c0_37, %c0_38], %65 {strides = array<i32>} : memref<8x32xf32, #tpu.memory_space<vmem>>, vector<8x32xf32>,
    return
  }
}

</mosaic_0001>

<llo_original>
// kernel: tpu_custom_call.1
$region0: #{tpu_custom_call.1}
  #allocation0 [shape = 'u32[]', space=smem, size = 0x4, offset = 0x4, fixed_abs, tag = 'smem constant byte address 0x4 - core index']
  #allocation1 [shape = 'u32[144,128]{1,0:T(1,128)}', space=vmem, size = 0x12000, scoped, tag = 'internal scratch']
  %s0 = inlined_call_operand.hbm [shape: f32[8,32], index: 0, kind: input, shape index: {}]
  %s1 = inlined_call_operand.hbm [shape: f32[8,32], index: 1, kind: input, shape index: {}]
  %s2 = inlined_call_operand.hbm [shape: bf16[64,512], index: 2, kind: input, shape index: {}]
  %s3 = inlined_call_operand.hbm [shape: bf16[640,128], index: 3, kind: input, shape index: {}]
  %s4 = inlined_call_operand.hbm [shape: f32[4,512], index: 4, kind: input, shape index: {}]
  %s5 = inlined_call_operand.hbm [shape: f32[8,32], index: 5, kind: output, shape index: {}]
  %s6 = sld [smem:[#allocation0]]
  $region50: #{tpu_custom_call.1} parent=0
    _
  %s8 = ssub.s32 1, %s6
  %s9 = scalar_select 0, %s8, %s6
  $region1: #{tpu_custom_call.1} parent=0
    #allocation2 [shape = 'u8[4096]{0}', space=vmem, size = 0x1000, scoped, tag = 'input window, operand 0, single buffered']
    #allocation3 [shape = 's32[1]{0}', space=sflag, size = 0x4, scoped, tag = 'scoped memory for tpu_custom_call.1']
    #allocation4 [shape = 's32[1]{0}', space=sflag, size = 0x4, scoped, tag = 'scoped memory for tpu_custom_call.1']
    #allocation5 [shape = 'u8[4096]{0}', space=vmem, size = 0x1000, scoped, tag = 'input window, operand 1, single buffered']
    #allocation6 [shape = 's32[1]{0}', space=sflag, size = 0x4, scoped, tag = 'scoped memory for tpu_custom_call.1']
    #allocation7 [shape = 'u8[65536]{0}', space=vmem, size = 0x10000, scoped, tag = 'input window, operand 2, single buffered']
    #allocation8 [shape = 'u8[163840]{0}', space=vmem, size = 0x28000, scoped, tag = 'input window, operand 3, single buffered']
    #allocation9 [shape = 's32[1]{0}', space=sflag, size = 0x4, scoped, tag = 'scoped memory for tpu_custom_call.1']
    #allocation10 [shape = 'u8[8192]{0}', space=vmem, size = 0x2000, scoped, tag = 'input window, operand 4, single buffered']
    #allocation11 [shape = 'u8[4096]{0}', space=vmem, size = 0x1000, scoped, tag = 'output window, operand 0, single buffered']
    %10 = vsyncpa [#allocation3], 0
    %11 = vsyncpa [#allocation6], 0
    %12 = vsyncpa [#allocation9], 0
    %13 = vsyncpa [#allocation4], 0
    // Predicated region
    $region2: #{tpu_custom_call.1} parent=1 // pred_check
      _
    $region3: #{tpu_custom_call.1} parent=1 // pred_check_branch
      %15 = sbr.rel (0) target = $region5
    $region4: #{tpu_custom_call.1} parent=1 // pred_region
      %s17 = ssub.s32 128, 128
      %18 = vsyncadd [#allocation3], %s17
      %s20 = sshll.u32 [#allocation2], 4
      %s21 = int_to_ptr.vmem [resolvable:$true] %s20
      %23 = dma.hbm_to_vmem [thread:$0]  %s0, 128, %s21, [#allocation3]
    $region5: #{tpu_custom_call.1} parent=1 // pred_fallthru
      _
    // Predicated region
    $region6: #{tpu_custom_call.1} parent=1 // pred_check
      _
    $region7: #{tpu_custom_call.1} parent=1 // pred_check_branch
      %25 = sbr.rel (0) target = $region9
    $region8: #{tpu_custom_call.1} parent=1 // pred_region
      %s27 = ssub.s32 128, 128
      %28 = vsyncadd [#allocation6], %s27
      %s30 = sshll.u32 [#allocation5], 4
      %s31 = int_to_ptr.vmem [resolvable:$true] %s30
      %33 = dma.hbm_to_vmem [thread:$0]  %s1, 128, %s31, [#allocation6]
    $region9: #{tpu_custom_call.1} parent=1 // pred_fallthru
      _
    // Predicated region
    $region10: #{tpu_custom_call.1} parent=1 // pred_check
      _
    $region11: #{tpu_custom_call.1} parent=1 // pred_check_branch
      %35 = sbr.rel (0) target = $region13
    $region12: #{tpu_custom_call.1} parent=1 // pred_region
      %s37 = ssub.s32 2048, 2048
      %38 = vsyncadd [#allocation6], %s37
      %s39 = sshll.u32 [#allocation7], 4
      %s40 = int_to_ptr.vmem [resolvable:$true] %s39
      %45 = dma.hbm_to_vmem [thread:$0]  %s2, 2048, %s40, [#allocation6], 256, 256, 16
    $region13: #{tpu_custom_call.1} parent=1 // pred_fallthru
      _
    // Predicated region
    $region14: #{tpu_custom_call.1} parent=1 // pred_check
      _
    $region15: #{tpu_custom_call.1} parent=1 // pred_check_branch
      %47 = sbr.rel (0) target = $region17
    $region16: #{tpu_custom_call.1} parent=1 // pred_region
      %s49 = ssub.s32 5120, 5120
      %50 = vsyncadd [#allocation9], %s49
      %s51 = sshll.u32 [#allocation8], 4
      %s52 = int_to_ptr.vmem [resolvable:$true] %s51
      %57 = dma.hbm_to_vmem [thread:$0]  %s3, 5120, %s52, [#allocation9], 64, 64, 4
    $region17: #{tpu_custom_call.1} parent=1 // pred_fallthru
      _
    // Predicated region
    $region18: #{tpu_custom_call.1} parent=1 // pred_check
      _
    $region19: #{tpu_custom_call.1} parent=1 // pred_check_branch
      %59 = sbr.rel (0) target = $region21
    $region20: #{tpu_custom_call.1} parent=1 // pred_region
      %s61 = ssub.s32 256, 256
      %62 = vsyncadd [#allocation9], %s61
      %s64 = sshll.u32 [#allocation10], 4
      %s65 = int_to_ptr.vmem [resolvable:$true] %s64
      %67 = dma.hbm_to_vmem [thread:$0]  %s4, 256, %s65, [#allocation9]
    $region21: #{tpu_custom_call.1} parent=1 // pred_fallthru
      _
    // Predicated region
    $region22: #{tpu_custom_call.1} parent=1 // pred_check
      _
    $region23: #{tpu_custom_call.1} parent=1 // pred_check_branch
      %69 = sbr.rel (0) target = $region25
    $region24: #{tpu_custom_call.1} parent=1 // pred_region
      %70 = dma.done [#allocation3], 128
    $region25: #{tpu_custom_call.1} parent=1 // pred_fallthru
      _
    // Predicated region
    $region26: #{tpu_custom_call.1} parent=1 // pred_check
      _
    $region27: #{tpu_custom_call.1} parent=1 // pred_check_branch
      %72 = sbr.rel (0) target = $region29
    $region28: #{tpu_custom_call.1} parent=1 // pred_region
      %73 = dma.done [#allocation6], 128
    $region29: #{tpu_custom_call.1} parent=1 // pred_fallthru
      _
    // Predicated region
    $region30: #{tpu_custom_call.1} parent=1 // pred_check
      _
    $region31: #{tpu_custom_call.1} parent=1 // pred_check_branch
      %75 = sbr.rel (0) target = $region33
    $region32: #{tpu_custom_call.1} parent=1 // pred_region
      %76 = dma.done [#allocation6], 2048
    $region33: #{tpu_custom_call.1} parent=1 // pred_fallthru
      _
    // Predicated region
    $region34: #{tpu_custom_call.1} parent=1 // pred_check
      _
    $region35: #{tpu_custom_call.1} parent=1 // pred_check_branch
      %78 = sbr.rel (0) target = $region37
    $region36: #{tpu_custom_call.1} parent=1 // pred_region
      %79 = dma.done [#allocation9], 5120
    $region37: #{tpu_custom_call.1} parent=1 // pred_fallthru
      _
    // Predicated region
    $region38: #{tpu_custom_call.1} parent=1 // pred_check
      _
    $region39: #{tpu_custom_call.1} parent=1 // pred_check_branch
      %81 = sbr.rel (0) target = $region41
    $region40: #{tpu_custom_call.1} parent=1 // pred_region
      %82 = dma.done [#allocation9], 256
    $region41: #{tpu_custom_call.1} parent=1 // pred_fallthru
      _
    %v84 = vld [vmem:[#allocation2] sm:$0xff]
    %v85 = vpack.c.bf16 %v84, %v84
    %v86 = vld [vmem:[#allocation5] sm:$0xff]
    %v87 = vpack.c.bf16 %v86, %v86
    %v88 = vld [vmem:[#allocation7] sm:$0xff]
    %v89 = vld [vmem:[#allocation7 + $0x8] sm:$0xff]
    %v90 = vld [vmem:[#allocation7 + $0x10] sm:$0xff]
    %v91 = vld [vmem:[#allocation7 + $0x18] sm:$0xff]
    %v92 = vld [vmem:[#allocation7 + $0x20] sm:$0xff]
    %v93 = vld [vmem:[#allocation7 + $0x28] sm:$0xff]
    %v94 = vld [vmem:[#allocation7 + $0x30] sm:$0xff]
    %v95 = vld [vmem:[#allocation7 + $0x38] sm:$0xff]
    %v96 = vld [vmem:[#allocation7 + $0x40] sm:$0xff]
    %v97 = vld [vmem:[#allocation7 + $0x48] sm:$0xff]
    %v98 = vld [vmem:[#allocation7 + $0x50] sm:$0xff]
    %v99 = vld [vmem:[#allocation7 + $0x58] sm:$0xff]
    %v100 = vld [vmem:[#allocation7 + $0x60] sm:$0xff]
    %v101 = vld [vmem:[#allocation7 + $0x68] sm:$0xff]
    %v102 = vld [vmem:[#allocation7 + $0x70] sm:$0xff]
    %v103 = vld [vmem:[#allocation7 + $0x78] sm:$0xff]
    %v112 = vunpack.c.l.b16 %v96
    %v113 = vunpack.c.h.b16 %v96
    %v114 = vunpack.c.l.b16 %v97
    %v115 = vunpack.c.h.b16 %v97
    %v116 = vunpack.c.l.b16 %v98
    %v117 = vunpack.c.h.b16 %v98
    %v118 = vunpack.c.l.b16 %v99
    %v119 = vunpack.c.h.b16 %v99
    %v120 = vunpack.c.l.b16 %v100
    %v121 = vunpack.c.h.b16 %v100
    %v122 = vunpack.c.l.b16 %v101
    %v123 = vunpack.c.h.b16 %v101
    %v124 = vunpack.c.l.b16 %v102
    %v125 = vunpack.c.h.b16 %v102
    %v126 = vunpack.c.l.b16 %v103
    %v127 = vunpack.c.h.b16 %v103
    %v128 = vpack.c.b16 %v116, %v112
    %v129 = vpack.c.b16 %v117, %v113
    %v130 = vpack.c.b16 %v118, %v114
    %v131 = vpack.c.b16 %v119, %v115
    %v132 = vpack.c.b16 %v124, %v120
    %v133 = vpack.c.b16 %v125, %v121
    %v134 = vpack.c.b16 %v126, %v122
    %v135 = vpack.c.b16 %v127, %v123
    %vm144 = vcmask 261120
    %v146 = vsel %vm144, %v87, 0
    %148 = vmatprep.subr.bf16.mxu0 0
    %149 = vmatpush1.bf16.msra.mxu0 0
    %150 = vmatprep.subr.bf16.mxu0 0
    %151 = vmatpush1.bf16.msra.mxu0 0
    %152 = vmatprep.subr.bf16.mxu0 0
    %153 = vmatpush1.bf16.msra.mxu0 0
    %154 = vmatprep.subr.bf16.mxu0 0
    %155 = vmatpush1.bf16.msra.mxu0 0
    %156 = vmatprep.subr.bf16.mxu0 0
    %157 = vmatpush1.bf16.msra.mxu0 0
    %158 = vmatprep.subr.bf16.mxu0 0
    %159 = vmatpush1.bf16.msra.mxu0 0
    %160 = vmatprep.subr.bf16.mxu0 %v133
    %161 = vmatpush1.bf16.msra.mxu0 %v132
    %162 = vmatprep.subr.bf16.mxu0 %v129
    %163 = vmatpush1.bf16.msra.mxu0 %v128
    %164 = vmatprep.subr.bf16.mxu0 0
    %165 = vmatpush2.bf16.msra.mxu0 0
    %166 = vmatprep.subr.bf16.mxu0 0
    %167 = vmatpush2.bf16.msra.mxu0 0
    %168 = vmatprep.subr.bf16.mxu0 0
    %169 = vmatpush2.bf16.msra.mxu0 0
    %170 = vmatprep.subr.bf16.mxu0 0
    %171 = vmatpush2.bf16.msra.mxu0 0
    %172 = vmatprep.subr.bf16.mxu0 0
    %173 = vmatpush2.bf16.msra.mxu0 0
    %174 = vmatprep.subr.bf16.mxu0 0
    %175 = vmatpush2.bf16.msra.mxu0 0
    %176 = vmatprep.subr.bf16.mxu0 0
    %177 = vmatpush2.bf16.msra.mxu0 0
    %178 = vmatprep.subr.bf16.mxu0 0
    %179 = vmatpush2.bf16.msra.mxu0 0
    %180 = vmatprep.mubr.bf16.mxu0 0
    %181 = vmatmul.mubr.bf16.gmra.mxu0 %v146
    %v182 = vpop.f32.mrf.mxu0
    %v183 = vadd.f32 0.0, %v182
    %v184 = vpop.f32.mrf.mxu0
    %v185 = vadd.f32 0.0, %v184
    %v186 = vpop.f32.mrf.mxu0
    %v187 = vpop.f32.mrf.mxu0
    %188 = vdwg.mxu0
    %189 = vmatprep.subr.bf16.mxu0 0
    %190 = vmatpush1.bf16.msra.mxu0 0
    %191 = vmatprep.subr.bf16.mxu0 0
    %192 = vmatpush1.bf16.msra.mxu0 0
    %193 = vmatprep.subr.bf16.mxu0 0
    %194 = vmatpush1.bf16.msra.mxu0 0
    %195 = vmatprep.subr.bf16.mxu0 0
    %196 = vmatpush1.bf16.msra.mxu0 0
    %197 = vmatprep.subr.bf16.mxu0 0
    %198 = vmatpush1.bf16.msra.mxu0 0
    %199 = vmatprep.subr.bf16.mxu0 0
    %200 = vmatpush1.bf16.msra.mxu0 0
    %201 = vmatprep.subr.bf16.mxu0 %v135
    %202 = vmatpush1.bf16.msra.mxu0 %v134
    %203 = vmatprep.subr.bf16.mxu0 %v131
    %204 = vmatpush1.bf16.msra.mxu0 %v130
    %205 = vmatprep.subr.bf16.mxu0 0
    %206 = vmatpush2.bf16.msra.mxu0 0
    %207 = vmatprep.subr.bf16.mxu0 0
    %208 = vmatpush2.bf16.msra.mxu0 0
    %209 = vmatprep.subr.bf16.mxu0 0
    %210 = vmatpush2.bf16.msra.mxu0 0
    %211 = vmatprep.subr.bf16.mxu0 0
    %212 = vmatpush2.bf16.msra.mxu0 0
    %213 = vmatprep.subr.bf16.mxu0 0
    %214 = vmatpush2.bf16.msra.mxu0 0
    %215 = vmatprep.subr.bf16.mxu0 0
    %216 = vmatpush2.bf16.msra.mxu0 0
    %217 = vmatprep.subr.bf16.mxu0 0
    %218 = vmatpush2.bf16.msra.mxu0 0
    %219 = vmatprep.subr.bf16.mxu0 0
    %220 = vmatpush2.bf16.msra.mxu0 0
    %221 = vmatprep.mubr.bf16.mxu0 0
    %222 = vmatmul.mubr.bf16.gmra.mxu0 %v146
    %v223 = vpop.f32.mrf.mxu0
    %v224 = vadd.f32 0.0, %v223
    %v225 = vpop.f32.mrf.mxu0
    %v226 = vadd.f32 0.0, %v225
    %v227 = vpop.f32.mrf.mxu0
    %v228 = vpop.f32.mrf.mxu0
    %229 = vdwg.mxu0
    %v238 = vunpack.c.l.b16 %v88
    %v239 = vunpack.c.h.b16 %v88
    %v240 = vunpack.c.l.b16 %v89
    %v241 = vunpack.c.h.b16 %v89
    %v242 = vunpack.c.l.b16 %v90
    %v243 = vunpack.c.h.b16 %v90
    %v244 = vunpack.c.l.b16 %v91
    %v245 = vunpack.c.h.b16 %v91
    %v246 = vunpack.c.l.b16 %v92
    %v247 = vunpack.c.h.b16 %v92
    %v248 = vunpack.c.l.b16 %v93
    %v249 = vunpack.c.h.b16 %v93
    %v250 = vunpack.c.l.b16 %v94
    %v251 = vunpack.c.h.b16 %v94
    %v252 = vunpack.c.l.b16 %v95
    %v253 = vunpack.c.h.b16 %v95
    %v254 = vpack.c.b16 %v242, %v238
    %v255 = vpack.c.b16 %v243, %v239
    %v256 = vpack.c.b16 %v244, %v240
    %v257 = vpack.c.b16 %v245, %v241
    %v258 = vpack.c.b16 %v250, %v246
    %v259 = vpack.c.b16 %v251, %v247
    %v260 = vpack.c.b16 %v252, %v248
    %v261 = vpack.c.b16 %v253, %v249
    %v271 = vsel %vm144, %v85, 0
    %273 = vmatprep.subr.bf16.mxu0 0
    %274 = vmatpush1.bf16.msra.mxu0 0
    %275 = vmatprep.subr.bf16.mxu0 0
    %276 = vmatpush1.bf16.msra.mxu0 0
    %277 = vmatprep.subr.bf16.mxu0 0
    %278 = vmatpush1.bf16.msra.mxu0 0
    %279 = vmatprep.subr.bf16.mxu0 0
    %280 = vmatpush1.bf16.msra.mxu0 0
    %281 = vmatprep.subr.bf16.mxu0 0
    %282 = vmatpush1.bf16.msra.mxu0 0
    %283 = vmatprep.subr.bf16.mxu0 0
    %284 = vmatpush1.bf16.msra.mxu0 0
    %285 = vmatprep.subr.bf16.mxu0 %v259
    %286 = vmatpush1.bf16.msra.mxu0 %v258
    %287 = vmatprep.subr.bf16.mxu0 %v255
    %288 = vmatpush1.bf16.msra.mxu0 %v254
    %289 = vmatprep.subr.bf16.mxu0 0
    %290 = vmatpush2.bf16.msra.mxu0 0
    %291 = vmatprep.subr.bf16.mxu0 0
    %292 = vmatpush2.bf16.msra.mxu0 0
    %293 = vmatprep.subr.bf16.mxu0 0
    %294 = vmatpush2.bf16.msra.mxu0 0
    %295 = vmatprep.subr.bf16.mxu0 0
    %296 = vmatpush2.bf16.msra.mxu0 0
    %297 = vmatprep.subr.bf16.mxu0 0
    %298 = vmatpush2.bf16.msra.mxu0 0
    %299 = vmatprep.subr.bf16.mxu0 0
    %300 = vmatpush2.bf16.msra.mxu0 0
    %301 = vmatprep.subr.bf16.mxu0 0
    %302 = vmatpush2.bf16.msra.mxu0 0
    %303 = vmatprep.subr.bf16.mxu0 0
    %304 = vmatpush2.bf16.msra.mxu0 0
    %305 = vmatprep.mubr.bf16.mxu0 0
    %306 = vmatmul.mubr.bf16.gmra.mxu0 %v271
    %v307 = vpop.f32.mrf.mxu0
    %v308 = vadd.f32 %v183, %v307
    %v309 = vpop.f32.mrf.mxu0
    %v310 = vadd.f32 %v185, %v309
    %v311 = vpop.f32.mrf.mxu0
    %v312 = vpop.f32.mrf.mxu0
    %313 = vdwg.mxu0
    %314 = vmatprep.subr.bf16.mxu0 0
    %315 = vmatpush1.bf16.msra.mxu0 0
    %316 = vmatprep.subr.bf16.mxu0 0
    %317 = vmatpush1.bf16.msra.mxu0 0
    %318 = vmatprep.subr.bf16.mxu0 0
    %319 = vmatpush1.bf16.msra.mxu0 0
    %320 = vmatprep.subr.bf16.mxu0 0
    %321 = vmatpush1.bf16.msra.mxu0 0
    %322 = vmatprep.subr.bf16.mxu0 0
    %323 = vmatpush1.bf16.msra.mxu0 0
    %324 = vmatprep.subr.bf16.mxu0 0
    %325 = vmatpush1.bf16.msra.mxu0 0
    %326 = vmatprep.subr.bf16.mxu0 %v261
    %327 = vmatpush1.bf16.msra.mxu0 %v260
    %328 = vmatprep.subr.bf16.mxu0 %v257
    %329 = vmatpush1.bf16.msra.mxu0 %v256
    %330 = vmatprep.subr.bf16.mxu0 0
    %331 = vmatpush2.bf16.msra.mxu0 0
    %332 = vmatprep.subr.bf16.mxu0 0
    %333 = vmatpush2.bf16.msra.mxu0 0
    %334 = vmatprep.subr.bf16.mxu0 0
    %335 = vmatpush2.bf16.msra.mxu0 0
    %336 = vmatprep.subr.bf16.mxu0 0
    %337 = vmatpush2.bf16.msra.mxu0 0
    %338 = vmatprep.subr.bf16.mxu0 0
    %339 = vmatpush2.bf16.msra.mxu0 0
    %340 = vmatprep.subr.bf16.mxu0 0
    %341 = vmatpush2.bf16.msra.mxu0 0
    %342 = vmatprep.subr.bf16.mxu0 0
    %343 = vmatpush2.bf16.msra.mxu0 0
    %344 = vmatprep.subr.bf16.mxu0 0
    %345 = vmatpush2.bf16.msra.mxu0 0
    %346 = vmatprep.mubr.bf16.mxu0 0
    %347 = vmatmul.mubr.bf16.gmra.mxu0 %v271
    %v348 = vpop.f32.mrf.mxu0
    %v349 = vadd.f32 %v224, %v348
    %v350 = vpop.f32.mrf.mxu0
    %v351 = vadd.f32 %v226, %v350
    %v352 = vpop.f32.mrf.mxu0
    %v353 = vpop.f32.mrf.mxu0
    %354 = vdwg.mxu0
    %v355 = vld [vmem:[#allocation10] ss:$4 sm:$0xf]
    %v357 = vlaneseq
    %v358 = vshrl.u32 %v357, 7
    %v359 = vsub.s32 0, %v358
    %v360 = vrot.slane %v355, %v359
    %v361 = vlaneseq
    %v362 = vshrl.u32 %v361, 7
    %v363 = vsub.s32 1, %v362
    %v364 = vrot.slane %v355, %v363
    %v365 = vlaneseq
    %v366 = vshrl.u32 %v365, 7
    %v367 = vsub.s32 2, %v366
    %v368 = vrot.slane %v355, %v367
    %v369 = vlaneseq
    %v370 = vshrl.u32 %v369, 7
    %v371 = vsub.s32 3, %v370
    %v372 = vrot.slane %v355, %v371
    %v377 = vadd.f32 %v308, %v360
    %v378 = vadd.f32 %v310, %v364
    %v379 = vadd.f32 %v349, %v368
    %v380 = vadd.f32 %v351, %v372
    %vm381 = vcmp.gt.f32.partialorder %v377, 0.0
    %vm382 = vcmp.gt.f32.partialorder %v378, 0.0
    %vm383 = vcmp.gt.f32.partialorder %v379, 0.0
    %vm384 = vcmp.gt.f32.partialorder %v380, 0.0
    %v385 = vmul.f32 %v377, 0.01
    %v386 = vmul.f32 %v378, 0.01
    %v387 = vmul.f32 %v379, 0.01
    %v388 = vmul.f32 %v380, 0.01
    %v389 = vsel %vm381, %v377, %v385
    %v390 = vsel %vm382, %v378, %v386
    %v391 = vsel %vm383, %v379, %v387
    %v392 = vsel %vm384, %v380, %v388
    %v393 = vpack.c.bf16 %v389, %v389
    %v394 = vpack.c.bf16 %v390, %v390
    %v395 = vpack.c.bf16 %v391, %v391
    %v396 = vpack.c.bf16 %v392, %v392
    %v397 = vld [vmem:[#allocation8] sm:$0xf]
    %v398 = vld [vmem:[#allocation8 + $0x4] sm:$0xf]
    %v399 = vld [vmem:[#allocation8 + $0x8] sm:$0xf]
    %v400 = vld [vmem:[#allocation8 + $0xc] sm:$0xf]
    %v401 = vld [vmem:[#allocation8 + $0x10] sm:$0xf]
    %v402 = vld [vmem:[#allocation8 + $0x14] sm:$0xf]
    %v403 = vld [vmem:[#allocation8 + $0x18] sm:$0xf]
    %v404 = vld [vmem:[#allocation8 + $0x1c] sm:$0xf]
    %v405 = vld [vmem:[#allocation8 + $0x20] sm:$0xf]
    %v406 = vld [vmem:[#allocation8 + $0x24] sm:$0xf]
    %v407 = vld [vmem:[#allocation8 + $0x28] sm:$0xf]
    %v408 = vld [vmem:[#allocation8 + $0x2c] sm:$0xf]
    %v409 = vld [vmem:[#allocation8 + $0x30] sm:$0xf]
    %v410 = vld [vmem:[#allocation8 + $0x34] sm:$0xf]
    %v411 = vld [vmem:[#allocation8 + $0x38] sm:$0xf]
    %v412 = vld [vmem:[#allocation8 + $0x3c] sm:$0xf]
    %v413 = vld [vmem:[#allocation8 + $0x40] sm:$0xf]
    %v414 = vld [vmem:[#allocation8 + $0x44] sm:$0xf]
    %v415 = vld [vmem:[#allocation8 + $0x48] sm:$0xf]
    %v416 = vld [vmem:[#allocation8 + $0x4c] sm:$0xf]
    %v417 = vld [vmem:[#allocation8 + $0x50] sm:$0xf]
    %v418 = vld [vmem:[#allocation8 + $0x54] sm:$0xf]
    %v419 = vld [vmem:[#allocation8 + $0x58] sm:$0xf]
    %v420 = vld [vmem:[#allocation8 + $0x5c] sm:$0xf]
    %v421 = vld [vmem:[#allocation8 + $0x60] sm:$0xf]
    %v422 = vld [vmem:[#allocation8 + $0x64] sm:$0xf]
    %v423 = vld [vmem:[#allocation8 + $0x68] sm:$0xf]
    %v424 = vld [vmem:[#allocation8 + $0x6c] sm:$0xf]
    %v425 = vld [vmem:[#allocation8 + $0x70] sm:$0xf]
    %v426 = vld [vmem:[#allocation8 + $0x74] sm:$0xf]
    %v427 = vld [vmem:[#allocation8 + $0x78] sm:$0xf]
    %v428 = vld [vmem:[#allocation8 + $0x7c] sm:$0xf]
    %v429 = vld [vmem:[#allocation8 + $0x80] sm:$0xf]
    %v430 = vld [vmem:[#allocation8 + $0x84] sm:$0xf]
    %v431 = vld [vmem:[#allocation8 + $0x88] sm:$0xf]
    %v432 = vld [vmem:[#allocation8 + $0x8c] sm:$0xf]
    %v433 = vld [vmem:[#allocation8 + $0x90] sm:$0xf]
    %v434 = vld [vmem:[#allocation8 + $0x94] sm:$0xf]
    %v435 = vld [vmem:[#allocation8 + $0x98] sm:$0xf]
    %v436 = vld [vmem:[#allocation8 + $0x9c] sm:$0xf]
    %v437 = vld [vmem:[#allocation8 + $0xa0] sm:$0xf]
    %v438 = vld [vmem:[#allocation8 + $0xa4] sm:$0xf]
    %v439 = vld [vmem:[#allocation8 + $0xa8] sm:$0xf]
    %v440 = vld [vmem:[#allocation8 + $0xac] sm:$0xf]
    %v441 = vld [vmem:[#allocation8 + $0xb0] sm:$0xf]
    %v442 = vld [vmem:[#allocation8 + $0xb4] sm:$0xf]
    %v443 = vld [vmem:[#allocation8 + $0xb8] sm:$0xf]
    %v444 = vld [vmem:[#allocation8 + $0xbc] sm:$0xf]
    %v445 = vld [vmem:[#allocation8 + $0xc0] sm:$0xf]
    %v446 = vld [vmem:[#allocation8 + $0xc4] sm:$0xf]
    %v447 = vld [vmem:[#allocation8 + $0xc8] sm:$0xf]
    %v448 = vld [vmem:[#allocation8 + $0xcc] sm:$0xf]
    %v449 = vld [vmem:[#allocation8 + $0xd0] sm:$0xf]
    %v450 = vld [vmem:[#allocation8 + $0xd4] sm:$0xf]
    %v451 = vld [vmem:[#allocation8 + $0xd8] sm:$0xf]
    %v452 = vld [vmem:[#allocation8 + $0xdc] sm:$0xf]
    %v453 = vld [vmem:[#allocation8 + $0xe0] sm:$0xf]
    %v454 = vld [vmem:[#allocation8 + $0xe4] sm:$0xf]
    %v455 = vld [vmem:[#allocation8 + $0xe8] sm:$0xf]
    %v456 = vld [vmem:[#allocation8 + $0xec] sm:$0xf]
    %v457 = vld [vmem:[#allocation8 + $0xf0] sm:$0xf]
    %v458 = vld [vmem:[#allocation8 + $0xf4] sm:$0xf]
    %v459 = vld [vmem:[#allocation8 + $0xf8] sm:$0xf]
    %v460 = vld [vmem:[#allocation8 + $0xfc] sm:$0xf]
    %v461 = vld [vmem:[#allocation10 + $0x1] sm:$0x1]
    %v462 = vlaneseq
    %v463 = vshrl.u32 %v462, 7
    %v464 = vsub.s32 0, %v463
    %v465 = vrot.slane %v461, %v464
    %v530 = vunpack.c.l.b16 %v397
    %v531 = vunpack.c.l.b16 %v398
    %v532 = vunpack.c.l.b16 %v399
    %v533 = vunpack.c.l.b16 %v400
    %v534 = vunpack.c.l.b16 %v401
    %v535 = vunpack.c.l.b16 %v402
    %v536 = vunpack.c.l.b16 %v403
    %v537 = vunpack.c.l.b16 %v404
    %v538 = vunpack.c.l.b16 %v405
    %v539 = vunpack.c.l.b16 %v406
    %v540 = vunpack.c.l.b16 %v407
    %v541 = vunpack.c.l.b16 %v408
    %v542 = vunpack.c.l.b16 %v409
    %v543 = vunpack.c.l.b16 %v410
    %v544 = vunpack.c.l.b16 %v411
    %v545 = vunpack.c.l.b16 %v412
    %v546 = vunpack.c.l.b16 %v413
    %v547 = vunpack.c.l.b16 %v414
    %v548 = vunpack.c.l.b16 %v415
    %v549 = vunpack.c.l.b16 %v416
    %v550 = vunpack.c.l.b16 %v417
    %v551 = vunpack.c.l.b16 %v418
    %v552 = vunpack.c.l.b16 %v419
    %v553 = vunpack.c.l.b16 %v420
    %v554 = vunpack.c.l.b16 %v421
    %v555 = vunpack.c.l.b16 %v422
    %v556 = vunpack.c.l.b16 %v423
    %v557 = vunpack.c.l.b16 %v424
    %v558 = vunpack.c.l.b16 %v425
    %v559 = vunpack.c.l.b16 %v426
    %v560 = vunpack.c.l.b16 %v427
    %v561 = vunpack.c.l.b16 %v428
    %v562 = vunpack.c.l.b16 %v429
    %v563 = vunpack.c.l.b16 %v430
    %v564 = vunpack.c.l.b16 %v431
    %v565 = vunpack.c.l.b16 %v432
    %v566 = vunpack.c.l.b16 %v433
    %v567 = vunpack.c.l.b16 %v434
    %v568 = vunpack.c.l.b16 %v435
    %v569 = vunpack.c.l.b16 %v436
    %v570 = vunpack.c.l.b16 %v437
    %v571 = vunpack.c.l.b16 %v438
    %v572 = vunpack.c.l.b16 %v439
    %v573 = vunpack.c.l.b16 %v440
    %v574 = vunpack.c.l.b16 %v441
    %v575 = vunpack.c.l.b16 %v442
    %v576 = vunpack.c.l.b16 %v443
    %v577 = vunpack.c.l.b16 %v444
    %v578 = vunpack.c.l.b16 %v445
    %v579 = vunpack.c.l.b16 %v446
    %v580 = vunpack.c.l.b16 %v447
    %v581 = vunpack.c.l.b16 %v448
    %v582 = vunpack.c.l.b16 %v449
    %v583 = vunpack.c.l.b16 %v450
    %v584 = vunpack.c.l.b16 %v451
    %v585 = vunpack.c.l.b16 %v452
    %v586 = vunpack.c.l.b16 %v453
    %v587 = vunpack.c.l.b16 %v454
    %v588 = vunpack.c.l.b16 %v455
    %v589 = vunpack.c.l.b16 %v456
    %v590 = vunpack.c.l.b16 %v457
    %v591 = vunpack.c.l.b16 %v458
    %v592 = vunpack.c.l.b16 %v459
    %v593 = vunpack.c.l.b16 %v460
    %v594 = vpack.c.b16 %v531, %v530
    %v595 = vpack.c.b16 %v533, %v532
    %v596 = vpack.c.b16 %v535, %v534
    %v597 = vpack.c.b16 %v537, %v536
    %v598 = vpack.c.b16 %v539, %v538
    %v599 = vpack.c.b16 %v541, %v540
    %v600 = vpack.c.b16 %v543, %v542
    %v601 = vpack.c.b16 %v545, %v544
    %v602 = vpack.c.b16 %v547, %v546
    %v603 = vpack.c.b16 %v549, %v548
    %v604 = vpack.c.b16 %v551, %v550
    %v605 = vpack.c.b16 %v553, %v552
    %v606 = vpack.c.b16 %v555, %v554
    %v607 = vpack.c.b16 %v557, %v556
    %v608 = vpack.c.b16 %v559, %v558
    %v609 = vpack.c.b16 %v561, %v560
    %v610 = vpack.c.b16 %v563, %v562
    %v611 = vpack.c.b16 %v565, %v564
    %v612 = vpack.c.b16 %v567, %v566
    %v613 = vpack.c.b16 %v569, %v568
    %v614 = vpack.c.b16 %v571, %v570
    %v615 = vpack.c.b16 %v573, %v572
    %v616 = vpack.c.b16 %v575, %v574
    %v617 = vpack.c.b16 %v577, %v576
    %v618 = vpack.c.b16 %v579, %v578
    %v619 = vpack.c.b16 %v581, %v580
    %v620 = vpack.c.b16 %v583, %v582
    %v621 = vpack.c.b16 %v585, %v584
    %v622 = vpack.c.b16 %v587, %v586
    %v623 = vpack.c.b16 %v589, %v588
    %v624 = vpack.c.b16 %v591, %v590
    %v625 = vpack.c.b16 %v593, %v592
    %658 = vmatprep.subr.bf16.mxu0 0
    %659 = vmatpush1.bf16.msra.mxu0 %v601
    %660 = vmatprep.subr.bf16.mxu0 0
    %661 = vmatpush1.bf16.msra.mxu0 %v600
    %662 = vmatprep.subr.bf16.mxu0 0
    %663 = vmatpush1.bf16.msra.mxu0 %v599
    %664 = vmatprep.subr.bf16.mxu0 0
    %665 = vmatpush1.bf16.msra.mxu0 %v598
    %666 = vmatprep.subr.bf16.mxu0 0
    %667 = vmatpush1.bf16.msra.mxu0 %v597
    %668 = vmatprep.subr.bf16.mxu0 0
    %669 = vmatpush1.bf16.msra.mxu0 %v596
    %670 = vmatprep.subr.bf16.mxu0 0
    %671 = vmatpush1.bf16.msra.mxu0 %v595
    %672 = vmatprep.subr.bf16.mxu0 0
    %673 = vmatpush1.bf16.msra.mxu0 %v594
    %674 = vmatprep.subr.bf16.mxu0 0
    %675 = vmatpush2.bf16.msra.mxu0 %v609
    %676 = vmatprep.subr.bf16.mxu0 0
    %677 = vmatpush2.bf16.msra.mxu0 %v608
    %678 = vmatprep.subr.bf16.mxu0 0
    %679 = vmatpush2.bf16.msra.mxu0 %v607
    %680 = vmatprep.subr.bf16.mxu0 0
    %681 = vmatpush2.bf16.msra.mxu0 %v606
    %682 = vmatprep.subr.bf16.mxu0 0
    %683 = vmatpush2.bf16.msra.mxu0 %v605
    %684 = vmatprep.subr.bf16.mxu0 0
    %685 = vmatpush2.bf16.msra.mxu0 %v604
    %686 = vmatprep.subr.bf16.mxu0 0
    %687 = vmatpush2.bf16.msra.mxu0 %v603
    %688 = vmatprep.subr.bf16.mxu0 0
    %689 = vmatpush2.bf16.msra.mxu0 %v602
    %690 = vmatprep.mubr.bf16.mxu0 %v394
    %691 = vmatmul.mubr.bf16.gmra.mxu0 %v393
    %v692 = vpop.f32.mrf.mxu0
    %v693 = vadd.f32 %v465, %v692
    %v694 = vpop.f32.mrf.mxu0
    %v695 = vpop.f32.mrf.mxu0
    %v696 = vpop.f32.mrf.mxu0
    %697 = vdwg.mxu0
    %698 = vmatprep.subr.bf16.mxu0 0
    %699 = vmatpush1.bf16.msra.mxu0 %v617
    %700 = vmatprep.subr.bf16.mxu0 0
    %701 = vmatpush1.bf16.msra.mxu0 %v616
    %702 = vmatprep.subr.bf16.mxu0 0
    %703 = vmatpush1.bf16.msra.mxu0 %v615
    %704 = vmatprep.subr.bf16.mxu0 0
    %705 = vmatpush1.bf16.msra.mxu0 %v614
    %706 = vmatprep.subr.bf16.mxu0 0
    %707 = vmatpush1.bf16.msra.mxu0 %v613
    %708 = vmatprep.subr.bf16.mxu0 0
    %709 = vmatpush1.bf16.msra.mxu0 %v612
    %710 = vmatprep.subr.bf16.mxu0 0
    %711 = vmatpush1.bf16.msra.mxu0 %v611
    %712 = vmatprep.subr.bf16.mxu0 0
    %713 = vmatpush1.bf16.msra.mxu0 %v610
    %714 = vmatprep.subr.bf16.mxu0 0
    %715 = vmatpush2.bf16.msra.mxu0 %v625
    %716 = vmatprep.subr.bf16.mxu0 0
    %717 = vmatpush2.bf16.msra.mxu0 %v624
    %718 = vmatprep.subr.bf16.mxu0 0
    %719 = vmatpush2.bf16.msra.mxu0 %v623
    %720 = vmatprep.subr.bf16.mxu0 0
    %721 = vmatpush2.bf16.msra.mxu0 %v622
    %722 = vmatprep.subr.bf16.mxu0 0
    %723 = vmatpush2.bf16.msra.mxu0 %v621
    %724 = vmatprep.subr.bf16.mxu0 0
    %725 = vmatpush2.bf16.msra.mxu0 %v620
    %726 = vmatprep.subr.bf16.mxu0 0
    %727 = vmatpush2.bf16.msra.mxu0 %v619
    %728 = vmatprep.subr.bf16.mxu0 0
    %729 = vmatpush2.bf16.msra.mxu0 %v618
    %730 = vmatprep.mubr.bf16.mxu0 %v396
    %731 = vmatmul.mubr.bf16.gmra.mxu0 %v395
    %v732 = vpop.f32.mrf.mxu0
    %v733 = vadd.f32 %v693, %v732
    %v734 = vpop.f32.mrf.mxu0
    %v735 = vpop.f32.mrf.mxu0
    %v736 = vpop.f32.mrf.mxu0
    %737 = vdwg.mxu0
    %vm738 = vcmp.gt.f32.partialorder %v733, 0.0
    %v739 = vmul.f32 %v733, 0.01
    %v740 = vsel %vm738, %v733, %v739
    %v741 = vpack.c.bf16 %v740, %v740
    %v742 = vld [vmem:[#allocation8 + $0x100] sm:$0xf]
    %v743 = vld [vmem:[#allocation8 + $0x104] sm:$0xf]
    %v744 = vld [vmem:[#allocation8 + $0x108] sm:$0xf]
    %v745 = vld [vmem:[#allocation8 + $0x10c] sm:$0xf]
    %v746 = vld [vmem:[#allocation8 + $0x110] sm:$0xf]
    %v747 = vld [vmem:[#allocation8 + $0x114] sm:$0xf]
    %v748 = vld [vmem:[#allocation8 + $0x118] sm:$0xf]
    %v749 = vld [vmem:[#allocation8 + $0x11c] sm:$0xf]
    %v750 = vld [vmem:[#allocation8 + $0x120] sm:$0xf]
    %v751 = vld [vmem:[#allocation8 + $0x124] sm:$0xf]
    %v752 = vld [vmem:[#allocation8 + $0x128] sm:$0xf]
    %v753 = vld [vmem:[#allocation8 + $0x12c] sm:$0xf]
    %v754 = vld [vmem:[#allocation8 + $0x130] sm:$0xf]
    %v755 = vld [vmem:[#allocation8 + $0x134] sm:$0xf]
    %v756 = vld [vmem:[#allocation8 + $0x138] sm:$0xf]
    %v757 = vld [vmem:[#allocation8 + $0x13c] sm:$0xf]
    %v758 = vld [vmem:[#allocation10 + $0x2] sm:$0x1]
    %v759 = vlaneseq
    %v760 = vshrl.u32 %v759, 7
    %v761 = vsub.s32 0, %v760
    %v762 = vrot.slane %v758, %v761
    %v779 = vunpack.c.l.b16 %v742
    %v780 = vunpack.c.l.b16 %v743
    %v781 = vunpack.c.l.b16 %v744
    %v782 = vunpack.c.l.b16 %v745
    %v783 = vunpack.c.l.b16 %v746
    %v784 = vunpack.c.l.b16 %v747
    %v785 = vunpack.c.l.b16 %v748
    %v786 = vunpack.c.l.b16 %v749
    %v787 = vunpack.c.l.b16 %v750
    %v788 = vunpack.c.l.b16 %v751
    %v789 = vunpack.c.l.b16 %v752
    %v790 = vunpack.c.l.b16 %v753
    %v791 = vunpack.c.l.b16 %v754
    %v792 = vunpack.c.l.b16 %v755
    %v793 = vunpack.c.l.b16 %v756
    %v794 = vunpack.c.l.b16 %v757
    %v795 = vpack.c.b16 %v780, %v779
    %v796 = vpack.c.b16 %v782, %v781
    %v797 = vpack.c.b16 %v784, %v783
    %v798 = vpack.c.b16 %v786, %v785
    %v799 = vpack.c.b16 %v788, %v787
    %v800 = vpack.c.b16 %v790, %v789
    %v801 = vpack.c.b16 %v792, %v791
    %v802 = vpack.c.b16 %v794, %v793
    %811 = vmatprep.subr.bf16.mxu0 0
    %812 = vmatpush1.bf16.msra.mxu0 %v802
    %813 = vmatprep.subr.bf16.mxu0 0
    %814 = vmatpush1.bf16.msra.mxu0 %v801
    %815 = vmatprep.subr.bf16.mxu0 0
    %816 = vmatpush1.bf16.msra.mxu0 %v800
    %817 = vmatprep.subr.bf16.mxu0 0
    %818 = vmatpush1.bf16.msra.mxu0 %v799
    %819 = vmatprep.subr.bf16.mxu0 0
    %820 = vmatpush1.bf16.msra.mxu0 %v798
    %821 = vmatprep.subr.bf16.mxu0 0
    %822 = vmatpush1.bf16.msra.mxu0 %v797
    %823 = vmatprep.subr.bf16.mxu0 0
    %824 = vmatpush1.bf16.msra.mxu0 %v796
    %825 = vmatprep.subr.bf16.mxu0 0
    %826 = vmatpush1.bf16.msra.mxu0 %v795
    %827 = vmatprep.subr.bf16.mxu0 0
    %828 = vmatpush2.bf16.msra.mxu0 0
    %829 = vmatprep.subr.bf16.mxu0 0
    %830 = vmatpush2.bf16.msra.mxu0 0
    %831 = vmatprep.subr.bf16.mxu0 0
    %832 = vmatpush2.bf16.msra.mxu0 0
    %833 = vmatprep.subr.bf16.mxu0 0
    %834 = vmatpush2.bf16.msra.mxu0 0
    %835 = vmatprep.subr.bf16.mxu0 0
    %836 = vmatpush2.bf16.msra.mxu0 0
    %837 = vmatprep.subr.bf16.mxu0 0
    %838 = vmatpush2.bf16.msra.mxu0 0
    %839 = vmatprep.subr.bf16.mxu0 0
    %840 = vmatpush2.bf16.msra.mxu0 0
    %841 = vmatprep.subr.bf16.mxu0 0
    %842 = vmatpush2.bf16.msra.mxu0 0
    %843 = vmatprep.mubr.bf16.mxu0 0
    %844 = vmatmul.mubr.bf16.gmra.mxu0 %v741
    %v845 = vpop.f32.mrf.mxu0
    %v846 = vadd.f32 %v762, %v845
    %v847 = vpop.f32.mrf.mxu0
    %v848 = vpop.f32.mrf.mxu0
    %v849 = vpop.f32.mrf.mxu0
    %850 = vdwg.mxu0
    %v851 = vsub.f32 0.0, %v846
    %v852 = vmul.f32 %v851, 1.442695
    %v853 = vpow.pop %v852
    %v854 = vadd.f32 %v853, 1.0
    %v855 = vrcp.pop %v854
    %v856 = vmul.f32 1.0, %v855
    %v857 = vld [vmem:[#allocation10 + $0x3] sm:$0x1]
    %v858 = vlaneseq
    %v859 = vshrl.u32 %v858, 7
    %v860 = vsub.s32 0, %v859
    %v861 = vrot.slane %v857, %v860
    %v862 = vmul.f32 %v856, %v861
    %863 = vadd.xlane.f32.xlu0 %v862
    %v864 = vpop.xlane.xlu0 %863
    %v865 = vsub.f32 0.0, %v864
    %v866 = vmul.f32 %v865, 1.442695
    %v867 = vpow.pop %v866
    %v868 = vadd.f32 %v867, 1.0
    %v869 = vrcp.pop %v868
    %v870 = vmul.f32 1.0, %v869
    %v871 = vrot.slane %v870, 4
    %v872 = vadd.f32 %v870, %v871
    %v873 = vrot.slane %v872, 2
    %v874 = vadd.f32 %v872, %v873
    %v875 = vrot.slane %v874, 1
    %v876 = vadd.f32 %v874, %v875
    %v877 = vrcp.pop 8.0
    %v878 = vmul.f32 %v876, %v877
    %v879 = vsub.f32 %v84, %v86
    %v880 = vmul.f32 %v878, %v879
    %v881 = vadd.f32 %v86, %v880
    %882 = vst.msk [vmem:[#allocation11] sm:$0xff] %vm144, %v881
    // Predicated region
    $region42: #{tpu_custom_call.1} parent=1 // pred_check
      _
    $region43: #{tpu_custom_call.1} parent=1 // pred_check_branch
      %884 = sbr.rel (0) target = $region45
    $region44: #{tpu_custom_call.1} parent=1 // pred_region
      %s886 = ssub.s32 128, 128
      %887 = vsyncadd [#allocation4], %s886
      %s889 = sshll.u32 [#allocation11], 4
      %s890 = int_to_ptr.vmem [resolvable:$true] %s889
      %892 = dma.vmem_to_hbm [thread:$0]  %s890, 128, %s5, [#allocation4]
    $region45: #{tpu_custom_call.1} parent=1 // pred_fallthru
      _
    // Predicated region
    $region46: #{tpu_custom_call.1} parent=1 // pred_check
      _
    $region47: #{tpu_custom_call.1} parent=1 // pred_check_branch
      %894 = sbr.rel (0) target = $region49
    $region48: #{tpu_custom_call.1} parent=1 // pred_region
      %895 = dma.done [#allocation4], 128
    $region49: #{tpu_custom_call.1} parent=1 // pred_fallthru
      _
    %896 = vsyncpa [#allocation3], 1
    %897 = vsyncpa [#allocation6], 1
    %898 = vsyncpa [#allocation9], 1
    %899 = vsyncpa [#allocation4], 1

</llo_original>
